<compile_context>
chip_gen: v7x
topology: tpu7x:2x2x1
jax: 0.10.0
libtpu: 0.0.40
codegen_flags: <defaults>
</compile_context>

<pallas_src>
import jax
import jax.numpy as jnp
from jax.experimental import pallas as pl
from jax.experimental.pallas import tpu as pltpu


def _make_maxpool_kernel(kernel_size: int, width: int):
    """Dense (stride-1) k x k window max with clamp-to-edge on right/bottom.

    Operates on a (rows, H*W) block where each row is an independent (b, c)
    spatial plane flattened row-major; `width` = W of the original plane.
    """
    k = int(kernel_size)
    w = int(width)

    def kernel(x_ref, o_ref):
        m = x_ref[...]                       # (r_blk, H*W) float32
        hw = m.shape[-1]

        # Positions sitting on the last column of their spatial row.
        col = jax.lax.broadcasted_iota(jnp.int32, m.shape, dimension=1)
        is_last_col = (col % w) == (w - 1)

        # Window max along W: shift left by 1 on the lane axis (k-1 times).
        # Clamp-to-edge == replicate right pad; the mask prevents a row from
        # picking up the first element of the next spatial row.
        for _ in range(k - 1):
            shifted = jnp.concatenate([m[:, 1:], m[:, hw - 1:]], axis=1)
            m = jnp.maximum(m, jnp.where(is_last_col, m, shifted))

        # Window max along H: shift by W in the flat axis (k-1 times).  The
        # tail block m[:, hw-w:] lands exactly on the last spatial row, which
        # gives the replicate bottom pad for free (no mask needed).
        for _ in range(k - 1):
            shifted = jnp.concatenate([m[:, w:], m[:, hw - w:]], axis=1)
            m = jnp.maximum(m, shifted)

        o_ref[...] = m.astype(o_ref.dtype)

    return kernel


def max_pool_stride1(x, kernel_size):
    """Pallas equivalent of MaxPoolStride1.forward.

    x: (B, C, H, W) float array (NCHW, as in PyTorch).
    Returns the same result as:
      MaxPool2d(kernel_size, stride=kernel_size-1)(replicate_pad_right_bottom(x)).
    """
    k = int(kernel_size)
    assert k >= 2, "MaxPoolStride1 needs kernel_size >= 2"
    pad = k - 1
    stride = pad  # nn.MaxPool2d(kernel_size, self.pad): stride = kernel_size - 1

    B, C, H, W = x.shape
    x = x.astype(jnp.float32)

    rows = B * C
    hw = H * W
    x2 = x.reshape(rows, hw)  # contiguous merge, no HBM transpose

    # Row-chunk block: multiple of 8 sublanes, ~2 MiB per buffer.
    if rows < 8:
        r_blk = rows
    else:
        target = max(1, (2 * 1024 * 1024) // (hw * 4))
        r_blk = max(8, (min(target, rows) // 8) * 8)
    grid = (pl.cdiv(rows, r_blk),)

    kernel = _make_maxpool_kernel(k, W)

    dense = pl.pallas_call(
        kernel,
        out_shape=jax.ShapeDtypeStruct((rows, hw), jnp.float32),
        grid_spec=pltpu.PrefetchScalarGridSpec(
            num_scalar_prefetch=0,
            grid=grid,
            in_specs=[pl.BlockSpec((r_blk, hw), lambda r: (r, 0))],
            out_specs=pl.BlockSpec((r_blk, hw), lambda r: (r, 0)),
        ),
        compiler_params=pltpu.CompilerParams(
            dimension_semantics=("parallel",)),
    )(x2)

    dense = dense.reshape(B, C, H, W)
    if stride == 1:
        # Canonical case (kernel_size == 2): output spatial size == input.
        return dense
    # kernel_size > 2  =>  stride = kernel_size - 1 > 1.
    # TODO(synk): fold the strided subsample into the kernel (emit only the
    # strided output positions) instead of slicing the dense result here.
    return dense[:, :, ::stride, ::stride]


def _reference(x, kernel_size):
    """Pure-JAX reference: replicate pad right/bottom + MaxPool2d(k, stride=k-1)."""
    k = int(kernel_size)
    pad = k - 1
    stride = pad
    xp = jnp.pad(x, ((0, 0), (0, 0), (0, pad), (0, pad)), mode='edge')
    return jax.lax.reduce_window(
        xp, -jnp.inf, jax.lax.max,
        window_dimensions=(1, 1, k, k),
        window_strides=(1, 1, stride, stride),
        padding='VALID')


if __name__ == "__main__":
    key = jax.random.PRNGKey(0)
    x = jax.random.normal(key, (2, 4, 16, 16), dtype=jnp.float32)

    # Canonical MaxPoolStride1 config: kernel_size=2 -> pad=1, stride=1.
    out2 = max_pool_stride1(x, kernel_size=2)
    out2 = jax.block_until_ready(out2)
    ref2 = _reference(x, 2)
    assert out2.shape == ref2.shape == (2, 4, 16, 16)
    assert bool(jnp.allclose(out2, ref2, atol=1e-6, rtol=1e-6))

    # General path: kernel_size=3 -> pad=2, stride=2 (module's exact semantics).
    out3 = max_pool_stride1(x, kernel_size=3)
    out3 = jax.block_until_ready(out3)
    ref3 = _reference(x, 3)
    assert out3.shape == ref3.shape == (2, 4, 8, 8)
    assert bool(jnp.allclose(out3, ref3, atol=1e-6, rtol=1e-6))

    print("KERNEL_OK")
</pallas_src>

<mosaic_0001>
module attributes {stable_mosaic.version = 11 : i64} {
  func.func @kernel(%arg0: i32, %arg1: memref<8x256xf32, #tpu.memory_space<vmem>>, %arg2: memref<8x256xf32, #tpu.memory_space<vmem>>) attributes {dimension_semantics = [#tpu.dimension_semantics<parallel>], iteration_bounds = array<i64: 1>, scalar_prefetch = 0 : i64, scratch_operands = 0 : i64, tpu.core_type = #tpu.core_type<tc>, window_params = [{transform_indices = @transform_0, window_bounds = array<i64: 8, 256>}, {transform_indices = @transform_1, window_bounds = array<i64: 8, 256>}]} {
    %c0 = arith.constant 0 : index
    %c0_0 = arith.constant 0 : index
    %0 = vector.load %arg1[%c0, %c0_0] : memref<8x256xf32, #tpu.memory_space<vmem>>, vector<8x256xf32>
    %1 = tpu.iota {dimensions = array<i32: 1>} : vector<8x256xi32>
    %c16_i32 = arith.constant 16 : i32
    %c0_i32 = arith.constant 0 : i32
    %2 = arith.cmpi eq, %c16_i32, %c0_i32 : i32
    %c1_i32 = arith.constant 1 : i32
    %3 = arith.select %2, %c1_i32, %c16_i32 : i32
    %4 = vector.broadcast %3 : i32 to vector<8x256xi32>
    %5 = arith.remsi %1, %4 : vector<8x256xi32>
    %c0_i32_1 = arith.constant 0 : i32
    %6 = vector.broadcast %c0_i32_1 : i32 to vector<8x256xi32>
    %7 = arith.cmpi ne, %5, %6 : vector<8x256xi32>
    %c0_i32_2 = arith.constant 0 : i32
    %8 = vector.broadcast %c0_i32_2 : i32 to vector<8x256xi32>
    %9 = arith.cmpi slt, %5, %8 : vector<8x256xi32>
    %c0_i32_3 = arith.constant 0 : i32
    %10 = arith.cmpi slt, %3, %c0_i32_3 : i32
    %11 = vector.broadcast %10 : i1 to vector<8x256xi1>
    %12 = vector.broadcast %11 : vector<8x256xi1> to vector<8x256xi1>
    %13 = arith.xori %9, %12 : vector<8x256xi1>
    %14 = arith.andi %13, %7 : vector<8x256xi1>
    %15 = vector.broadcast %3 : i32 to vector<8x256xi32>
    %16 = arith.addi %5, %15 : vector<8x256xi32>
    %17 = arith.select %14, %16, %5 : vector<8x256xi1>, vector<8x256xi32>
    %c15_i32 = arith.constant 15 : i32
    %18 = vector.broadcast %c15_i32 : i32 to vector<8x256xi32>
    %19 = arith.cmpi eq, %17, %18 : vector<8x256xi32>
    %20 = vector.extract_strided_slice %0 {offsets = [0, 1], sizes = [8, 255], strides = [1, 1]} : vector<8x256xf32> to vector<8x255xf32>
    %21 = vector.extract_strided_slice %0 {offsets = [0, 255], sizes = [8, 1], strides = [1, 1]} : vector<8x256xf32> to vector<8x1xf32>
    %22 = tpu.concatenate %20, %21 in 1 : vector<8x255xf32>, vector<8x1xf32> -> vector<8x256xf32>
    %23 = arith.select %19, %0, %22 : vector<8x256xi1>, vector<8x256xf32>
    %24 = arith.maximumf %0, %23 : vector<8x256xf32>
    %25 = vector.extract_strided_slice %24 {offsets = [0, 16], sizes = [8, 240], strides = [1, 1]} : vector<8x256xf32> to vector<8x240xf32>
    %26 = vector.extract_strided_slice %24 {offsets = [0, 240], sizes = [8, 16], strides = [1, 1]} : vector<8x256xf32> to vector<8x16xf32>
    %27 = tpu.concatenate %25, %26 in 1 : vector<8x240xf32>, vector<8x16xf32> -> vector<8x256xf32>
    %28 = arith.maximumf %24, %27 : vector<8x256xf32>
    %c0_4 = arith.constant 0 : index
    %c0_5 = arith.constant 0 : index
    %29 = vector.load %arg2[%c0_4, %c0_5] : memref<8x256xf32, #tpu.memory_space<vmem>>, vector<8x256xf32>
    tpu.vector_store %arg2[%c0_4, %c0_5], %28 {strides = array<i32>} : memref<8x256xf32, #tpu.memory_space<vmem>>, vector<8x256xf32>,
    return
  }
  func.func @transform_0(%arg0: i32) -> (i32, i32) {
    %c0_i32 = arith.constant 0 : i32
    %c0_i32_0 = arith.constant 0 : i32
    return %arg0, %c0_i32 : i32, i32
  }
  func.func @transform_1(%arg0: i32) -> (i32, i32) {
    %c0_i32 = arith.constant 0 : i32
    %c0_i32_0 = arith.constant 0 : i32
    return %arg0, %c0_i32 : i32, i32
  }
}

</mosaic_0001>

<llo_original>
// kernel: tpu_custom_call.1
$region0: #{tpu_custom_call.1}
  #allocation0 [shape = 'u32[]', space=smem, size = 0x4, offset = 0x4, fixed_abs, tag = 'smem constant byte address 0x4 - core index']
  #allocation1 [shape = 'u32[144,128]{1,0:T(1,128)}', space=vmem, size = 0x12000, scoped, tag = 'internal scratch']
  %s0 = inlined_call_operand.hbm [shape: f32[8,256], index: 0, kind: input, shape index: {}]
  %s1 = inlined_call_operand.hbm [shape: f32[8,256], index: 1, kind: output, shape index: {}]
  %s2 = sld [smem:[#allocation0]]
  $region18: #{tpu_custom_call.1} parent=0
    _
  %s4 = ssub.s32 1, %s2
  %s5 = scalar_select 0, %s4, %s2
  $region1: #{tpu_custom_call.1} parent=0
    #allocation2 [shape = 'u8[8192]{0}', space=vmem, size = 0x2000, scoped, tag = 'input window, operand 0, single buffered']
    #allocation3 [shape = 's32[1]{0}', space=sflag, size = 0x4, scoped, tag = 'scoped memory for tpu_custom_call.1']
    #allocation4 [shape = 's32[1]{0}', space=sflag, size = 0x4, scoped, tag = 'scoped memory for tpu_custom_call.1']
    #allocation5 [shape = 'u8[8192]{0}', space=vmem, size = 0x2000, scoped, tag = 'output window, operand 0, single buffered']
    %6 = vsyncpa [#allocation3], 0
    %7 = vsyncpa [#allocation4], 0
    // Predicated region
    $region2: #{tpu_custom_call.1} parent=1 // pred_check
      _
    $region3: #{tpu_custom_call.1} parent=1 // pred_check_branch
      %9 = sbr.rel (0) target = $region5
    $region4: #{tpu_custom_call.1} parent=1 // pred_region
      %s11 = ssub.s32 256, 256
      %12 = vsyncadd [#allocation3], %s11
      %s14 = sshll.u32 [#allocation2], 4
      %s15 = int_to_ptr.vmem [resolvable:$true] %s14
      %17 = dma.hbm_to_vmem [thread:$0]  %s0, 256, %s15, [#allocation3]
    $region5: #{tpu_custom_call.1} parent=1 // pred_fallthru
      _
    // Predicated region
    $region6: #{tpu_custom_call.1} parent=1 // pred_check
      _
    $region7: #{tpu_custom_call.1} parent=1 // pred_check_branch
      %19 = sbr.rel (0) target = $region9
    $region8: #{tpu_custom_call.1} parent=1 // pred_region
      %20 = dma.done [#allocation3], 256
    $region9: #{tpu_custom_call.1} parent=1 // pred_fallthru
      _
    %v21 = vld [vmem:[#allocation2] sm:$0xff]
    %v22 = vld [vmem:[#allocation2 + $0x8] sm:$0xff]
    %v23 = vlaneseq
    %v24 = vand.u32 %v23, 127
    %v25 = vadd.s32 %v24, 128
    %vm26 = vcmp.lt.s32.totalorder %v24, 0
    %v27 = vsub.s32 0, %v24
    %v28 = vsel %vm26, %v27, %v24
    %v29 = vshrl.u32 %v28, 4
    %v30 = vand.u32 %v28, 15
    %v31 = vsub.s32 0, %v30
    %v32 = vsel %vm26, %v31, %v30
    %vm33 = vcmp.lt.s32.totalorder %v25, 0
    %v34 = vsub.s32 0, %v25
    %v35 = vsel %vm33, %v34, %v25
    %v36 = vshrl.u32 %v35, 4
    %v37 = vand.u32 %v35, 15
    %v38 = vsub.s32 0, %v37
    %v39 = vsel %vm33, %v38, %v37
    %vm40 = vcmp.ne.s32.totalorder %v32, 0
    %vm41 = vcmp.ne.s32.totalorder %v39, 0
    %vm42 = vcmp.lt.s32.totalorder %v32, 0
    %vm43 = vcmp.lt.s32.totalorder %v39, 0
    %vm44 = vmand %vm42, %vm40
    %vm45 = vmand %vm43, %vm41
    %v46 = vadd.s32 %v32, 16
    %v47 = vadd.s32 %v39, 16
    %v48 = vsel %vm44, %v46, %v32
    %v49 = vsel %vm45, %v47, %v39
    %vm50 = vcmp.eq.s32.totalorder %v48, 15
    %vm51 = vcmp.eq.s32.totalorder %v49, 15
    %54 = vrot.lane.b32.xlu0 %v21, 127
    %v55 = vpop.permute.xlu0 %54
    %56 = vrot.lane.b32.xlu0 %v22, 127
    %v57 = vpop.permute.xlu0 %56
    %vm58 = vcmask 1039360
    %v59 = vsel %vm58, %v55, %v57
    %v62 = vsel %vm58, %v57, %v22
    %v63 = vsel %vm50, %v21, %v59
    %v64 = vsel %vm51, %v22, %v62
    %v65 = vmax.f32 %v21, %v63
    %v66 = vmax.f32 %v22, %v64
    %69 = vrot.lane.b32.xlu0 %v65, 112
    %v70 = vpop.permute.xlu0 %69
    %71 = vrot.lane.b32.xlu0 %v66, 112
    %v72 = vpop.permute.xlu0 %71
    %vm73 = vcmask 916480
    %v74 = vsel %vm73, %v70, %v72
    %v77 = vsel %vm73, %v72, %v66
    %v78 = vmax.f32 %v65, %v74
    %v79 = vmax.f32 %v66, %v77
    %80 = vst [vmem:[#allocation5] sm:$0xff] %v78
    %81 = vst [vmem:[#allocation5 + $0x8] sm:$0xff] %v79
    // Predicated region
    $region10: #{tpu_custom_call.1} parent=1 // pred_check
      _
    $region11: #{tpu_custom_call.1} parent=1 // pred_check_branch
      %83 = sbr.rel (0) target = $region13
    $region12: #{tpu_custom_call.1} parent=1 // pred_region
      %s85 = ssub.s32 256, 256
      %86 = vsyncadd [#allocation4], %s85
      %s88 = sshll.u32 [#allocation5], 4
      %s89 = int_to_ptr.vmem [resolvable:$true] %s88
      %91 = dma.vmem_to_hbm [thread:$0]  %s89, 256, %s1, [#allocation4]
    $region13: #{tpu_custom_call.1} parent=1 // pred_fallthru
      _
    // Predicated region
    $region14: #{tpu_custom_call.1} parent=1 // pred_check
      _
    $region15: #{tpu_custom_call.1} parent=1 // pred_check_branch
      %93 = sbr.rel (0) target = $region17
    $region16: #{tpu_custom_call.1} parent=1 // pred_region
      %94 = dma.done [#allocation4], 256
    $region17: #{tpu_custom_call.1} parent=1 // pred_fallthru
      _
    %95 = vsyncpa [#allocation3], 1
    %96 = vsyncpa [#allocation4], 1

</llo_original>
